<compile_context>
chip_gen: v7x
topology: tpu7x:2x2x1
jax: 0.10.0
libtpu: 0.0.40
codegen_flags: <defaults>
</compile_context>

<pallas_src>
import jax
import jax.numpy as jnp
from jax import lax
from jax.experimental import pallas as pl
from jax.experimental.pallas import tpu as pltpu

EPS = 1e-5
LANE = 128
SUBLANE = 8


def _round_up(x, m):
    return ((x + m - 1) // m) * m


# --------------------------- Pallas kernels ---------------------------------

def conv_stats_kernel(xcol_ref, w_ref, y_ref, stats_ref):
    """Pass 1: im2col matmul on the MXU + per-channel sum / sum-of-squares.

    stats_ref has a constant index_map -> it is a VMEM-resident accumulator
    across the (arbitrary) M grid axis.  Rows: 0 = sum(y), 1 = sum(y*y).
    """
    i = pl.program_id(0)

    y = jnp.dot(xcol_ref[...], w_ref[...], preferred_element_type=jnp.float32)
    y_ref[...] = y

    @pl.when(i == 0)
    def _init():
        stats_ref[...] = jnp.zeros_like(stats_ref)

    stats_ref[0:1, :] += jnp.sum(y, axis=0, keepdims=True)
    stats_ref[1:2, :] += jnp.sum(y * y, axis=0, keepdims=True)


def bn_relu_kernel(y_ref, scale_ref, shift_ref, o_ref):
    """Pass 2: BN apply (scale/shift fold mean, var, gamma, beta) + ReLU."""
    o_ref[...] = jnp.maximum(y_ref[...] * scale_ref[...] + shift_ref[...], 0.0)


# --------------------------- Host-side wrappers ------------------------------

def _im2col_nhwc(x_nhwc):
    """(N,H,W,C) -> (N*H*W, 9*C) patches for 3x3 conv, padding=1.

    K index layout is (kh*3 + kw)*C + c, matching the weight matrix below.
    """
    # TODO(synk): replace wrapper im2col with an in-kernel implicit GEMM
    # (9 shifted accumulating dots on a haloed NHWC row slab) to cut input HBM
    # traffic ~9x; left as-is to keep boundary handling simple and correct.
    N, H, W, C = x_nhwc.shape
    xp = jnp.pad(x_nhwc, ((0, 0), (1, 1), (1, 1), (0, 0)))
    patches = [xp[:, kh:kh + H, kw:kw + W, :] for kh in range(3) for kw in range(3)]
    p = jnp.stack(patches, axis=3)            # (N, H, W, 9, C)
    return p.reshape(N * H * W, 9 * C)


def _conv_bn_relu_nhwc(x_nhwc, w, gamma, beta, *, tile_m=512):
    """One fused conv3x3(pad=1) + BatchNorm(train) + ReLU stage (channels-last)."""
    N, H, W, C = x_nhwc.shape
    Co = w.shape[0]
    M = N * H * W
    K = 9 * C

    Kp = _round_up(K, LANE)                    # lane-dense MXU contraction dim
    Cop = _round_up(Co, LANE)                  # lane-dense output channels
    tile_m = min(_round_up(tile_m, SUBLANE), _round_up(M, SUBLANE))
    M_pad = _round_up(M, tile_m)
    n_tiles = M_pad // tile_m

    # Zero-padded operands: padded rows/cols contribute nothing to the matmul or
    # the batch statistics (there is no conv bias in the kernel — it cancels in BN).
    xcol = _im2col_nhwc(x_nhwc)
    xcol = jnp.pad(xcol, ((0, M_pad - M), (0, Kp - K)))
    wmat = w.transpose(2, 3, 1, 0).reshape(K, Co)      # [(kh*3+kw)*C + c, o]
    wmat = jnp.pad(wmat, ((0, Kp - K), (0, Cop - Co)))

    cost = pl.CostEstimate(
        flops=2 * M_pad * Kp * Cop,
        transcendentals=0,
        bytes_accessed=4 * (M_pad * Kp + Kp * Cop + M_pad * Cop + 8 * Cop))

    # ---- Pass 1: tiled matmul + per-channel statistics accumulation ----
    y, stats = pl.pallas_call(
        conv_stats_kernel,
        out_shape=(jax.ShapeDtypeStruct((M_pad, Cop), jnp.float32),
                   jax.ShapeDtypeStruct((SUBLANE, Cop), jnp.float32)),
        grid=(n_tiles,),
        in_specs=[
            pl.BlockSpec((tile_m, Kp), lambda i: (i, 0)),
            pl.BlockSpec((Kp, Cop), lambda i: (0, 0)),     # resident weights
        ],
        out_specs=(
            pl.BlockSpec((tile_m, Cop), lambda i: (i, 0)),
            pl.BlockSpec((SUBLANE, Cop), lambda i: (0, 0)),  # resident accumulator
        ),
        compiler_params=pltpu.CompilerParams(
            dimension_semantics=("arbitrary",),   # stats accumulate across M tiles
            vmem_limit_bytes=32 * 1024 * 1024),
        cost_estimate=cost,
    )(xcol, wmat)

    # ---- Finalize BN statistics (tiny per-channel vectors, f32) ----
    inv_m = 1.0 / float(M)
    mean = stats[0] * inv_m
    var = jnp.maximum(stats[1] * inv_m - mean * mean, 0.0)   # biased variance
    gamma_p = jnp.pad(gamma, (0, Cop - Co))
    beta_p = jnp.pad(beta, (0, Cop - Co))
    scale = gamma_p * lax.rsqrt(var + EPS)
    shift = beta_p - mean * scale

    # ---- Pass 2: BN apply + ReLU (pure streaming, parallel over M tiles) ----
    out = pl.pallas_call(
        bn_relu_kernel,
        out_shape=jax.ShapeDtypeStruct((M_pad, Cop), jnp.float32),
        grid=(n_tiles,),
        in_specs=[
            pl.BlockSpec((tile_m, Cop), lambda i: (i, 0)),
            pl.BlockSpec((1, Cop), lambda i: (0, 0)),
            pl.BlockSpec((1, Cop), lambda i: (0, 0)),
        ],
        out_specs=pl.BlockSpec((tile_m, Cop), lambda i: (i, 0)),
        compiler_params=pltpu.CompilerParams(
            dimension_semantics=("parallel",),
            vmem_limit_bytes=32 * 1024 * 1024),
    )(y, scale.reshape(1, Cop), shift.reshape(1, Cop))

    return out[:M, :Co].reshape(N, H, W, Co)


def conv_block_forward(x_nchw, params, *, tile_m=512):
    # NCHW -> NHWC once; stay channels-last (lane-dense) between the two stages.
    # params["b1"]/["b2"] (conv biases) are intentionally unused here: with
    # training-mode BatchNorm they are exactly cancelled by mean subtraction.
    x = x_nchw.transpose(0, 2, 3, 1)
    x = _conv_bn_relu_nhwc(x, params["w1"], params["g1"], params["be1"], tile_m=tile_m)
    x = _conv_bn_relu_nhwc(x, params["w2"], params["g2"], params["be2"], tile_m=tile_m)
    return x.transpose(0, 3, 1, 2)            # back to NCHW once at the very end


# --------------------------- Pure-JAX reference ------------------------------

def _ref_block(x, params):
    def conv(x, w, b):
        y = lax.conv_general_dilated(
            x, w, window_strides=(1, 1), padding=((1, 1), (1, 1)),
            dimension_numbers=("NCHW", "OIHW", "NCHW"))
        return y + b.reshape(1, -1, 1, 1)

    def bn_relu(y, g, be):
        mean = y.mean(axis=(0, 2, 3), keepdims=True)
        var = ((y - mean) ** 2).mean(axis=(0, 2, 3), keepdims=True)
        yh = (y - mean) / jnp.sqrt(var + EPS)
        return jnp.maximum(g.reshape(1, -1, 1, 1) * yh + be.reshape(1, -1, 1, 1), 0.0)

    y = bn_relu(conv(x, params["w1"], params["b1"]), params["g1"], params["be1"])
    y = bn_relu(conv(y, params["w2"], params["b2"]), params["g2"], params["be2"])
    return y


if __name__ == "__main__":
    N, in_c, out_c, H, W = 2, 4, 8, 16, 16
    key = jax.random.PRNGKey(0)
    ks = jax.random.split(key, 5)

    x = jax.random.normal(ks[0], (N, in_c, H, W), dtype=jnp.float32)
    params = {
        "w1": jax.random.normal(ks[1], (out_c, in_c, 3, 3), jnp.float32) * 0.1,
        "b1": jax.random.normal(ks[2], (out_c,), jnp.float32) * 0.1,
        "g1": jnp.ones((out_c,), jnp.float32),    # BatchNorm weight init = 1
        "be1": jnp.zeros((out_c,), jnp.float32),  # BatchNorm bias init = 0
        "w2": jax.random.normal(ks[3], (out_c, out_c, 3, 3), jnp.float32) * 0.1,
        "b2": jax.random.normal(ks[4], (out_c,), jnp.float32) * 0.1,
        "g2": jnp.ones((out_c,), jnp.float32),
        "be2": jnp.zeros((out_c,), jnp.float32),
    }

    # tile_m=128 on this small test so the tiled/accumulating path (grid of 4
    # M-tiles per stage) is actually exercised; default is 512 for real shapes.
    out = jax.block_until_ready(conv_block_forward(x, params, tile_m=128))
    ref = _ref_block(x, params)

    assert out.shape == (N, out_c, H, W), out.shape
    assert jnp.allclose(out, ref, atol=1e-4, rtol=1e-4), "mismatch vs JAX reference"
    print("KERNEL_OK")
</pallas_src>

<mosaic_0001>
module attributes {stable_mosaic.version = 11 : i64} {
  func.func @conv_stats_kernel(%arg0: i32, %arg1: memref<128x128xf32, #tpu.memory_space<vmem>>, %arg2: memref<128x128xf32, #tpu.memory_space<vmem>>, %arg3: memref<128x128xf32, #tpu.memory_space<vmem>>, %arg4: memref<8x128xf32, #tpu.memory_space<vmem>>) attributes {dimension_semantics = [#tpu.dimension_semantics<arbitrary>], iteration_bounds = array<i64: 4>, scalar_prefetch = 0 : i64, scratch_operands = 0 : i64, tpu.core_type = #tpu.core_type<tc>, window_params = [{transform_indices = @transform_0, window_bounds = array<i64: 128, 128>}, {pipeline_mode = #tpu.pipeline_mode<synchronous>, transform_indices = @transform_1, window_bounds = array<i64: 128, 128>}, {transform_indices = @transform_2, window_bounds = array<i64: 128, 128>}, {pipeline_mode = #tpu.pipeline_mode<synchronous>, transform_indices = @transform_3, window_bounds = array<i64: 8, 128>}]} {
    %c0 = arith.constant 0 : index
    %c0_0 = arith.constant 0 : index
    %0 = vector.load %arg1[%c0, %c0_0] : memref<128x128xf32, #tpu.memory_space<vmem>>, vector<128x128xf32>
    %c0_1 = arith.constant 0 : index
    %c0_2 = arith.constant 0 : index
    %1 = vector.load %arg2[%c0_1, %c0_2] : memref<128x128xf32, #tpu.memory_space<vmem>>, vector<128x128xf32>
    %cst = arith.constant dense<0.000000e+00> : vector<128x128xf32>
    %2 = tpu.matmul %0, %1, %cst {dimension_numbers = #tpu.dot_dimension_numbers<[1], [0], [0], [1], [0, 0, 1, 1], [], []>} : vector<128x128xf32>, vector<128x128xf32>, vector<128x128xf32> -> vector<128x128xf32>
    %c0_3 = arith.constant 0 : index
    %c0_4 = arith.constant 0 : index
    %3 = vector.load %arg3[%c0_3, %c0_4] : memref<128x128xf32, #tpu.memory_space<vmem>>, vector<128x128xf32>
    tpu.vector_store %arg3[%c0_3, %c0_4], %2 {strides = array<i32>} : memref<128x128xf32, #tpu.memory_space<vmem>>, vector<128x128xf32>,
    %c0_i32 = arith.constant 0 : i32
    %4 = arith.cmpi eq, %arg0, %c0_i32 : i32
    %5 = arith.extui %4 : i1 to i32
    %c0_i32_5 = arith.constant 0 : i32
    %6 = arith.cmpi ne, %5, %c0_i32_5 : i32
    scf.if %6 {
      %cst_15 = arith.constant 0.000000e+00 : f32
      %18 = vector.broadcast %cst_15 : f32 to vector<8x128xf32>
      %c0_16 = arith.constant 0 : index
      %c0_17 = arith.constant 0 : index
      %19 = vector.load %arg4[%c0_16, %c0_17] : memref<8x128xf32, #tpu.memory_space<vmem>>, vector<8x128xf32>
      tpu.vector_store %arg4[%c0_16, %c0_17], %18 {strides = array<i32>} : memref<8x128xf32, #tpu.memory_space<vmem>>, vector<8x128xf32>,
    } else {
    }
    %c0_6 = arith.constant 0 : index
    %c0_7 = arith.constant 0 : index
    %7 = vector.load %arg4[%c0_6, %c0_7] : memref<8x128xf32, #tpu.memory_space<vmem>>, vector<1x128xf32>
    %cst_8 = arith.constant dense<0.000000e+00> : vector<128xf32>
    %8 = vector.multi_reduction <add>, %2, %cst_8 [0] : vector<128x128xf32> to vector<128xf32>
    %9 = vector.shape_cast %8 : vector<128xf32> to vector<1x128xf32>
    %10 = arith.addf %7, %9 : vector<1x128xf32>
    %c0_9 = arith.constant 0 : index
    %c0_10 = arith.constant 0 : index
    %11 = vector.load %arg4[%c0_9, %c0_10] : memref<8x128xf32, #tpu.memory_space<vmem>>, vector<1x128xf32>
    tpu.vector_store %arg4[%c0_9, %c0_10], %10 {strides = array<i32>} : memref<8x128xf32, #tpu.memory_space<vmem>>, vector<1x128xf32>,
    %c1 = arith.constant 1 : index
    %c0_11 = arith.constant 0 : index
    %12 = vector.load %arg4[%c1, %c0_11] : memref<8x128xf32, #tpu.memory_space<vmem>>, vector<1x128xf32>
    %13 = arith.mulf %2, %2 : vector<128x128xf32>
    %cst_12 = arith.constant dense<0.000000e+00> : vector<128xf32>
    %14 = vector.multi_reduction <add>, %13, %cst_12 [0] : vector<128x128xf32> to vector<128xf32>
    %15 = vector.shape_cast %14 : vector<128xf32> to vector<1x128xf32>
    %16 = arith.addf %12, %15 : vector<1x128xf32>
    %c1_13 = arith.constant 1 : index
    %c0_14 = arith.constant 0 : index
    %17 = vector.load %arg4[%c1_13, %c0_14] : memref<8x128xf32, #tpu.memory_space<vmem>>, vector<1x128xf32>
    tpu.vector_store %arg4[%c1_13, %c0_14], %16 {strides = array<i32>} : memref<8x128xf32, #tpu.memory_space<vmem>>, vector<1x128xf32>,
    return
  }
  func.func @transform_0(%arg0: i32) -> (i32, i32) {
    %c0_i32 = arith.constant 0 : i32
    %c0_i32_0 = arith.constant 0 : i32
    return %arg0, %c0_i32 : i32, i32
  }
  func.func @transform_1(%arg0: i32) -> (i32, i32) {
    %c0_i32 = arith.constant 0 : i32
    %c0_i32_0 = arith.constant 0 : i32
    %c0_i32_1 = arith.constant 0 : i32
    return %c0_i32, %c0_i32_0 : i32, i32
  }
  func.func @transform_2(%arg0: i32) -> (i32, i32) {
    %c0_i32 = arith.constant 0 : i32
    %c0_i32_0 = arith.constant 0 : i32
    return %arg0, %c0_i32 : i32, i32
  }
  func.func @transform_3(%arg0: i32) -> (i32, i32) {
    %c0_i32 = arith.constant 0 : i32
    %c0_i32_0 = arith.constant 0 : i32
    %c0_i32_1 = arith.constant 0 : i32
    return %c0_i32, %c0_i32_0 : i32, i32
  }
}

</mosaic_0001>

<llo_original>
// kernel: tpu_custom_call.1
$region0: #{tpu_custom_call.1}
  #allocation0 [shape = 'u32[]', space=smem, size = 0x4, offset = 0x4, fixed_abs, tag = 'smem constant byte address 0x4 - core index']
  #allocation1 [shape = 'u32[144,128]{1,0:T(1,128)}', space=vmem, size = 0x12000, scoped, tag = 'internal scratch']
  %s0 = inlined_call_operand.hbm [shape: f32[512,128], index: 0, kind: input, shape index: {}]
  %s1 = inlined_call_operand.hbm [shape: f32[128,128], index: 1, kind: input, shape index: {}]
  %s2 = inlined_call_operand.hbm [shape: f32[512,128], index: 2, kind: output, shape index: {0}]
  %s3 = inlined_call_operand.hbm [shape: f32[8,128], index: 3, kind: output, shape index: {1}]
  %4 = xla_tuple %s2, %s3
  %s5 = sld [smem:[#allocation0]]
  $region61: #{tpu_custom_call.1} parent=0
    _
  %s7 = ssub.s32 1, %s5
  %s8 = scalar_select 0, %s7, %s5
  $region1: #{tpu_custom_call.1} parent=0
    #allocation2 [shape = 'u8[131072]{0}', space=vmem, size = 0x20000, scoped, tag = 'input window, operand 0']
    #allocation3 [shape = 's32[2]{0}', space=sflag, size = 0x8, scoped, tag = 'scoped memory for tpu_custom_call.1']
    #allocation4 [shape = 's32[2]{0}', space=sflag, size = 0x8, scoped, tag = 'scoped memory for tpu_custom_call.1']
    #allocation5 [shape = 'u8[65536]{0}', space=vmem, size = 0x10000, scoped, tag = 'input window, operand 1, single buffered']
    #allocation6 [shape = 's32[1]{0}', space=sflag, size = 0x4, scoped, tag = 'scoped memory for tpu_custom_call.1']
    #allocation7 [shape = 'u8[131072]{0}', space=vmem, size = 0x20000, scoped, tag = 'output window, operand 0']
    #allocation8 [shape = 'u8[4096]{0}', space=vmem, size = 0x1000, scoped, tag = 'output window, operand 1, single buffered']
    #allocation9 [shape = 's32[1]{0}', space=sflag, size = 0x4, scoped, tag = 'scoped memory for tpu_custom_call.1']
    %9 = vsyncpa [#allocation3], 0
    %s10 = scalar_lea.sflag [#allocation3], 1
    %11 = vsyncpa %s10, 0
    %12 = vsyncpa [#allocation6], 0
    %13 = vsyncpa [#allocation4], 0
    %s14 = scalar_lea.sflag [#allocation4], 1
    %15 = vsyncpa %s14, 0
    %16 = vsyncpa [#allocation9], 0
    loop: start=0, step=1, limit=6
    $region2: #{tpu_custom_call.1} parent=1 // loop_pre_header
      _
    $region3: #{tpu_custom_call.1} parent=1 // loop_header
      %s18 = sphi 0, %s22
      %p19 = scmp.ge.s32.totalorder %s18, 6
      %s28 = sphi 0, %s30
      %s31 = sphi 0, %s28
      %s32 = sphi 0, %s31
      %s48 = sphi 0, %s32
      %s52 = sphi 0, %s52
      %s54 = sphi 0, %s52
      %s55 = sphi 0, %s54
      %s69 = sphi 0, %s55
      %s75 = sphi 0, %s77
      %s78 = sphi 0, %s75
      %s79 = sphi 0, %s78
      %s95 = sphi 0, %s79
      %s99 = sphi 0, %s99
      %s101 = sphi 0, %s99
      %s102 = sphi 0, %s101
      %s116 = sphi 0, %s102
    $region4: #{tpu_custom_call.1} parent=1 // loop_header_branch
      %21 = sbr.rel (%p19) target = $region8
    $region5: #{tpu_custom_call.1} parent=1 // loop_body
      %s23 = ssub.s32 %s18, 1
      %s24 = ssub.s32 %s18, 2
      %s25 = sadd.s32 %s18, 1
      %s26 = ssub.s32 %s18, %s25
      %p27 = scmp.eq.s32.totalorder %s26, 0
      %s29 = sadd.s32 %s28, 1
      %s30 = scalar_select %p27, %s28, %s29
      %p33 = pneg %p27
      %p34 = scmp.eq.s32.totalorder %s18, 3
      %p35 = por %p33, %p34
      %p36 = scmp.ne.s32.totalorder %s28, %s31
      %p37 = scmp.eq.s32.totalorder %s18, 0
      %p38 = por %p36, %p37
      %p39 = scmp.ne.s32.totalorder %s28, %s31
      %p40 = scmp.eq.s32.totalorder %s23, 3
      %p41 = por %p39, %p40
      %p42 = scmp.ne.s32.totalorder %s31, %s32
      %p43 = scmp.eq.s32.totalorder %s23, 0
      %p44 = por %p42, %p43
      %p45 = scmp.ne.s32.totalorder %s31, %s32
      %p46 = scmp.eq.s32.totalorder %s24, 3
      %p47 = por %p45, %p46
      %p49 = scmp.ne.s32.totalorder %s32, %s48
      %p50 = scmp.eq.s32.totalorder %s24, 0
      %p51 = por %p49, %p50
      %s53 = sadd.s32 %s52, 1
      %p56 = scmp.eq.s32.totalorder %s18, 3
      %p57 = scmp.ne.s32.totalorder %s52, %s54
      %p58 = scmp.eq.s32.totalorder %s18, 0
      %p59 = por %p57, %p58
      %p60 = scmp.ne.s32.totalorder %s52, %s54
      %p61 = scmp.eq.s32.totalorder %s23, 3
      %p62 = por %p60, %p61
      %p63 = scmp.ne.s32.totalorder %s54, %s55
      %p64 = scmp.eq.s32.totalorder %s23, 0
      %p65 = por %p63, %p64
      %p66 = scmp.ne.s32.totalorder %s54, %s55
      %p67 = scmp.eq.s32.totalorder %s24, 3
      %p68 = por %p66, %p67
      %p70 = scmp.ne.s32.totalorder %s55, %s69
      %p71 = scmp.eq.s32.totalorder %s24, 0
      %p72 = por %p70, %p71
      %s73 = ssub.s32 %s18, %s25
      %p74 = scmp.eq.s32.totalorder %s73, 0
      %s76 = sadd.s32 %s75, 1
      %s77 = scalar_select %p74, %s75, %s76
      %p80 = pneg %p74
      %p81 = scmp.eq.s32.totalorder %s18, 3
      %p82 = por %p80, %p81
      %p83 = scmp.ne.s32.totalorder %s75, %s78
      %p84 = scmp.eq.s32.totalorder %s18, 0
      %p85 = por %p83, %p84
      %p86 = scmp.ne.s32.totalorder %s75, %s78
      %p87 = scmp.eq.s32.totalorder %s23, 3
      %p88 = por %p86, %p87
      %p89 = scmp.ne.s32.totalorder %s78, %s79
      %p90 = scmp.eq.s32.totalorder %s23, 0
      %p91 = por %p89, %p90
      %p92 = scmp.ne.s32.totalorder %s78, %s79
      %p93 = scmp.eq.s32.totalorder %s24, 3
      %p94 = por %p92, %p93
      %p96 = scmp.ne.s32.totalorder %s79, %s95
      %p97 = scmp.eq.s32.totalorder %s24, 0
      %p98 = por %p96, %p97
      %s100 = sadd.s32 %s99, 1
      %p103 = scmp.eq.s32.totalorder %s18, 3
      %p104 = scmp.ne.s32.totalorder %s99, %s101
      %p105 = scmp.eq.s32.totalorder %s18, 0
      %p106 = por %p104, %p105
      %p107 = scmp.ne.s32.totalorder %s99, %s101
      %p108 = scmp.eq.s32.totalorder %s23, 3
      %p109 = por %p107, %p108
      %p110 = scmp.ne.s32.totalorder %s101, %s102
      %p111 = scmp.eq.s32.totalorder %s23, 0
      %p112 = por %p110, %p111
      %p113 = scmp.ne.s32.totalorder %s101, %s102
      %p114 = scmp.eq.s32.totalorder %s24, 3
      %p115 = por %p113, %p114
      %p117 = scmp.ne.s32.totalorder %s102, %s116
      %p118 = scmp.eq.s32.totalorder %s24, 0
      %p119 = por %p117, %p118
      %p120 = scmp.le.s32.totalorder 1, %s18
      %p121 = scmp.lt.s32.totalorder %s18, 5
      %p122 = pnand %p120, %p121
      %p123 = pneg %p122
      // Predicated region
      $region9: #{tpu_custom_call.1} parent=5 // pred_check
        _
      $region10: #{tpu_custom_call.1} parent=5 // pred_check_branch
        %125 = sbr.rel (%p122) target = $region12
      $region11: #{tpu_custom_call.1} parent=5 // pred_region
        %s126 = ssub.s32 %s18, 1
        // Predicated region
        $region13: #{tpu_custom_call.1} parent=11 // pred_check
          %p127 = pneg %p65
        $region14: #{tpu_custom_call.1} parent=11 // pred_check_branch
          %129 = sbr.rel (%p127) target = $region16
        $region15: #{tpu_custom_call.1} parent=11 // pred_region
          %s131 = ssub.s32 2048, 2048
          %132 = vsyncadd [#allocation6], %s131
          %s133 = sshll.u32 [#allocation5], 4
          %s134 = int_to_ptr.vmem [resolvable:$true] %s133
          %139 = dma.hbm_to_vmem [thread:$0]  %s1, 2048, %s134, [#allocation6], 128, 128, 8
        $region16: #{tpu_custom_call.1} parent=11 // pred_fallthru
          _
      $region12: #{tpu_custom_call.1} parent=5 // pred_fallthru
        _
      %p140 = scmp.lt.s32.totalorder %s18, 4
      // Predicated region
      $region17: #{tpu_custom_call.1} parent=5 // pred_check
        %p141 = pneg %p140
      $region18: #{tpu_custom_call.1} parent=5 // pred_check_branch
        %143 = sbr.rel (%p141) target = $region20
      $region19: #{tpu_custom_call.1} parent=5 // pred_region
        // Predicated region
        $region21: #{tpu_custom_call.1} parent=19 // pred_check
          %p144 = pneg %p38
        $region22: #{tpu_custom_call.1} parent=19 // pred_check_branch
          %146 = sbr.rel (%p144) target = $region24
        $region23: #{tpu_custom_call.1} parent=19 // pred_region
          %s147 = sand.u32 %s28, 1
          %s148 = scalar_lea.sflag [#allocation3], %s147
          %s149 = sand.u32 %s28, 1
          %s150 = smul.addr %s149, 128
          %s151 = scalar_lea.vmem [#allocation2], %s150
          %s152 = smul.u32 16, %s18
          %s154 = ssub.s32 2048, 2048
          %155 = vsyncadd %s148, %s154
          %s156 = smul.addr %s152, 128
          %s157 = scalar_lea.hbm %s0, %s156
          %s158 = sshll.u32 %s151, 4
          %s159 = int_to_ptr.vmem [resolvable:$true] %s158
          %164 = dma.hbm_to_vmem [thread:$0]  %s157, 2048, %s159, %s148, 128, 128, 8
        $region24: #{tpu_custom_call.1} parent=19 // pred_fallthru
          _
      $region20: #{tpu_custom_call.1} parent=5 // pred_fallthru
        _
      %p165 = scmp.le.s32.totalorder 1, %s18
      %p166 = scmp.lt.s32.totalorder %s18, 5
      %p167 = pnand %p165, %p166
      %p168 = pneg %p167
      // Predicated region
      $region25: #{tpu_custom_call.1} parent=5 // pred_check
        _
      $region26: #{tpu_custom_call.1} parent=5 // pred_check_branch
        %170 = sbr.rel (%p167) target = $region28
      $region27: #{tpu_custom_call.1} parent=5 // pred_region
        %s171 = ssub.s32 %s18, 1
        %s172 = sand.u32 %s31, 1
        %s173 = scalar_lea.sflag [#allocation3], %s172
        %s174 = sand.u32 %s31, 1
        %s175 = smul.addr %s174, 128
        %s176 = scalar_lea.vmem [#allocation2], %s175
        // Predicated region
        $region29: #{tpu_custom_call.1} parent=27 // pred_check
          %p177 = pneg %p44
        $region30: #{tpu_custom_call.1} parent=27 // pred_check_branch
          %179 = sbr.rel (%p177) target = $region32
        $region31: #{tpu_custom_call.1} parent=27 // pred_region
          %180 = dma.done %s173, 2048
        $region32: #{tpu_custom_call.1} parent=27 // pred_fallthru
          _
        // Predicated region
        $region33: #{tpu_custom_call.1} parent=27 // pred_check
          %p181 = pneg %p65
        $region34: #{tpu_custom_call.1} parent=27 // pred_check_branch
          %183 = sbr.rel (%p181) target = $region36
        $region35: #{tpu_custom_call.1} parent=27 // pred_region
          %184 = dma.done [#allocation6], 2048
        $region36: #{tpu_custom_call.1} parent=27 // pred_fallthru
          _
        %s185 = sand.u32 %s31, 1
        %s186 = scalar_lea.sflag [#allocation3], %s185
        %s187 = sand.u32 %s31, 1
        %s188 = smul.addr %s187, 128
        %s189 = scalar_lea.vmem [#allocation2], %s188
        %p190 = pneg %p44
        %p191 = pneg %p41
        %p192 = pneg %p65
        %p193 = pneg %p62
        %p194 = pneg %p91
        %p195 = pneg %p88
        %s196 = sand.u32 %s78, 1
        %s197 = scalar_lea.sflag [#allocation4], %s196
        %s198 = sand.u32 %s78, 1
        %s199 = smul.addr %s198, 128
        %s200 = scalar_lea.vmem [#allocation7], %s199
        %p201 = pneg %p112
        %p202 = pneg %p109
        %s203 = smul.u32 16, %s23
        %s204 = smul.u32 16, %s23
        %v205 = vld [vmem:[%s176] sm:$0xff]
        %v206 = vld [vmem:[%s176 + $0x8] sm:$0xff]
        %v207 = vld [vmem:[%s176 + $0x10] sm:$0xff]
        %v208 = vld [vmem:[%s176 + $0x18] sm:$0xff]
        %v209 = vld [vmem:[%s176 + $0x20] sm:$0xff]
        %v210 = vld [vmem:[%s176 + $0x28] sm:$0xff]
        %v211 = vld [vmem:[%s176 + $0x30] sm:$0xff]
        %v212 = vld [vmem:[%s176 + $0x38] sm:$0xff]
        %v213 = vld [vmem:[%s176 + $0x40] sm:$0xff]
        %v214 = vld [vmem:[%s176 + $0x48] sm:$0xff]
        %v215 = vld [vmem:[%s176 + $0x50] sm:$0xff]
        %v216 = vld [vmem:[%s176 + $0x58] sm:$0xff]
        %v217 = vld [vmem:[%s176 + $0x60] sm:$0xff]
        %v218 = vld [vmem:[%s176 + $0x68] sm:$0xff]
        %v219 = vld [vmem:[%s176 + $0x70] sm:$0xff]
        %v220 = vld [vmem:[%s176 + $0x78] sm:$0xff]
        %v221 = vld [vmem:[#allocation5] sm:$0xff]
        %v222 = vld [vmem:[#allocation5 + $0x8] sm:$0xff]
        %v223 = vld [vmem:[#allocation5 + $0x10] sm:$0xff]
        %v224 = vld [vmem:[#allocation5 + $0x18] sm:$0xff]
        %v225 = vld [vmem:[#allocation5 + $0x20] sm:$0xff]
        %v226 = vld [vmem:[#allocation5 + $0x28] sm:$0xff]
        %v227 = vld [vmem:[#allocation5 + $0x30] sm:$0xff]
        %v228 = vld [vmem:[#allocation5 + $0x38] sm:$0xff]
        %v229 = vld [vmem:[#allocation5 + $0x40] sm:$0xff]
        %v230 = vld [vmem:[#allocation5 + $0x48] sm:$0xff]
        %v231 = vld [vmem:[#allocation5 + $0x50] sm:$0xff]
        %v232 = vld [vmem:[#allocation5 + $0x58] sm:$0xff]
        %v233 = vld [vmem:[#allocation5 + $0x60] sm:$0xff]
        %v234 = vld [vmem:[#allocation5 + $0x68] sm:$0xff]
        %v235 = vld [vmem:[#allocation5 + $0x70] sm:$0xff]
        %v236 = vld [vmem:[#allocation5 + $0x78] sm:$0xff]
        %237 = vmatprep.subr.mxu0 0.0
        %238 = vmatpush1.msra.mxu0 %v221
        %239 = vmatprep.subr.mxu0 0.0
        %240 = vmatpush1.msra.mxu0 %v222
        %241 = vmatprep.subr.mxu0 0.0
        %242 = vmatpush1.msra.mxu0 %v223
        %243 = vmatprep.subr.mxu0 0.0
        %244 = vmatpush1.msra.mxu0 %v224
        %245 = vmatprep.subr.mxu0 0.0
        %246 = vmatpush1.msra.mxu0 %v225
        %247 = vmatprep.subr.mxu0 0.0
        %248 = vmatpush1.msra.mxu0 %v226
        %249 = vmatprep.subr.mxu0 0.0
        %250 = vmatpush1.msra.mxu0 %v227
        %251 = vmatprep.subr.mxu0 0.0
        %252 = vmatpush1.msra.mxu0 %v228
        %253 = vmatprep.subr.mxu0 0.0
        %254 = vmatpush1.msra.mxu0 %v229
        %255 = vmatprep.subr.mxu0 0.0
        %256 = vmatpush1.msra.mxu0 %v230
        %257 = vmatprep.subr.mxu0 0.0
        %258 = vmatpush1.msra.mxu0 %v231
        %259 = vmatprep.subr.mxu0 0.0
        %260 = vmatpush1.msra.mxu0 %v232
        %261 = vmatprep.subr.mxu0 0.0
        %262 = vmatpush1.msra.mxu0 %v233
        %263 = vmatprep.subr.mxu0 0.0
        %264 = vmatpush1.msra.mxu0 %v234
        %265 = vmatprep.subr.mxu0 0.0
        %266 = vmatpush1.msra.mxu0 %v235
        %267 = vmatprep.subr.mxu0 0.0
        %268 = vmatpush1.msra.mxu0 %v236
        %269 = vmatprep.subr.mxu0 0.0
        %270 = vmatpush1.msra.mxu0 0.0
        %271 = vmatprep.subr.mxu0 0.0
        %272 = vmatpush1.msra.mxu0 0.0
        %273 = vmatprep.subr.mxu0 0.0
        %274 = vmatpush1.msra.mxu0 0.0
        %275 = vmatprep.subr.mxu0 0.0
        %276 = vmatpush1.msra.mxu0 0.0
        %277 = vmatprep.subr.mxu0 0.0
        %278 = vmatpush1.msra.mxu0 0.0
        %279 = vmatprep.subr.mxu0 0.0
        %280 = vmatpush1.msra.mxu0 0.0
        %281 = vmatprep.subr.mxu0 0.0
        %282 = vmatpush1.msra.mxu0 0.0
        %283 = vmatprep.subr.mxu0 0.0
        %284 = vmatpush1.msra.mxu0 0.0
        %285 = vmatprep.subr.mxu0 0.0
        %286 = vmatpush1.msra.mxu0 0.0
        %287 = vmatprep.subr.mxu0 0.0
        %288 = vmatpush1.msra.mxu0 0.0
        %289 = vmatprep.subr.mxu0 0.0
        %290 = vmatpush1.msra.mxu0 0.0
        %291 = vmatprep.subr.mxu0 0.0
        %292 = vmatpush1.msra.mxu0 0.0
        %293 = vmatprep.subr.mxu0 0.0
        %294 = vmatpush1.msra.mxu0 0.0
        %295 = vmatprep.subr.mxu0 0.0
        %296 = vmatpush1.msra.mxu0 0.0
        %297 = vmatprep.subr.mxu0 0.0
        %298 = vmatpush1.msra.mxu0 0.0
        %299 = vmatprep.subr.mxu0 0.0
        %300 = vmatpush1.msra.mxu0 0.0
        %301 = vmatprep.mubr.f32.mxu0 0.0
        %302 = vmatmul.mubr.f32.gmra.mrb[0].mxu0 %v205
        %v303 = vpop.f32.mrb[0].mxu0
        %v304 = vadd.f32 0.0, %v303
        %v305 = vpop.f32.mrb[0].mxu0
        %306 = vmatprep.mubr.f32.mxu0 0.0
        %307 = vmatmul.mubr.f32.gmra.mrb[0].mxu0 %v206
        %v308 = vpop.f32.mrb[0].mxu0
        %v309 = vadd.f32 0.0, %v308
        %v310 = vpop.f32.mrb[0].mxu0
        %311 = vmatprep.mubr.f32.mxu0 0.0
        %312 = vmatmul.mubr.f32.gmra.mrb[0].mxu0 %v207
        %v313 = vpop.f32.mrb[0].mxu0
        %v314 = vadd.f32 0.0, %v313
        %v315 = vpop.f32.mrb[0].mxu0
        %316 = vmatprep.mubr.f32.mxu0 0.0
        %317 = vmatmul.mubr.f32.gmra.mrb[0].mxu0 %v208
        %v318 = vpop.f32.mrb[0].mxu0
        %v319 = vadd.f32 0.0, %v318
        %v320 = vpop.f32.mrb[0].mxu0
        %321 = vmatprep.mubr.f32.mxu0 0.0
        %322 = vmatmul.mubr.f32.gmra.mrb[0].mxu0 %v209
        %v323 = vpop.f32.mrb[0].mxu0
        %v324 = vadd.f32 0.0, %v323
        %v325 = vpop.f32.mrb[0].mxu0
        %326 = vmatprep.mubr.f32.mxu0 0.0
        %327 = vmatmul.mubr.f32.gmra.mrb[0].mxu0 %v210
        %v328 = vpop.f32.mrb[0].mxu0
        %v329 = vadd.f32 0.0, %v328
        %v330 = vpop.f32.mrb[0].mxu0
        %331 = vmatprep.mubr.f32.mxu0 0.0
        %332 = vmatmul.mubr.f32.gmra.mrb[0].mxu0 %v211
        %v333 = vpop.f32.mrb[0].mxu0
        %v334 = vadd.f32 0.0, %v333
        %v335 = vpop.f32.mrb[0].mxu0
        %336 = vmatprep.mubr.f32.mxu0 0.0
        %337 = vmatmul.mubr.f32.gmra.mrb[0].mxu0 %v212
        %v338 = vpop.f32.mrb[0].mxu0
        %v339 = vadd.f32 0.0, %v338
        %v340 = vpop.f32.mrb[0].mxu0
        %341 = vmatprep.mubr.f32.mxu0 0.0
        %342 = vmatmul.mubr.f32.gmra.mrb[0].mxu0 %v213
        %v343 = vpop.f32.mrb[0].mxu0
        %v344 = vadd.f32 0.0, %v343
        %v345 = vpop.f32.mrb[0].mxu0
        %346 = vmatprep.mubr.f32.mxu0 0.0
        %347 = vmatmul.mubr.f32.gmra.mrb[0].mxu0 %v214
        %v348 = vpop.f32.mrb[0].mxu0
        %v349 = vadd.f32 0.0, %v348
        %v350 = vpop.f32.mrb[0].mxu0
        %351 = vmatprep.mubr.f32.mxu0 0.0
        %352 = vmatmul.mubr.f32.gmra.mrb[0].mxu0 %v215
        %v353 = vpop.f32.mrb[0].mxu0
        %v354 = vadd.f32 0.0, %v353
        %v355 = vpop.f32.mrb[0].mxu0
        %356 = vmatprep.mubr.f32.mxu0 0.0
        %357 = vmatmul.mubr.f32.gmra.mrb[0].mxu0 %v216
        %v358 = vpop.f32.mrb[0].mxu0
        %v359 = vadd.f32 0.0, %v358
        %v360 = vpop.f32.mrb[0].mxu0
        %361 = vmatprep.mubr.f32.mxu0 0.0
        %362 = vmatmul.mubr.f32.gmra.mrb[0].mxu0 %v217
        %v363 = vpop.f32.mrb[0].mxu0
        %v364 = vadd.f32 0.0, %v363
        %v365 = vpop.f32.mrb[0].mxu0
        %366 = vmatprep.mubr.f32.mxu0 0.0
        %367 = vmatmul.mubr.f32.gmra.mrb[0].mxu0 %v218
        %v368 = vpop.f32.mrb[0].mxu0
        %v369 = vadd.f32 0.0, %v368
        %v370 = vpop.f32.mrb[0].mxu0
        %371 = vmatprep.mubr.f32.mxu0 0.0
        %372 = vmatmul.mubr.f32.gmra.mrb[0].mxu0 %v219
        %v373 = vpop.f32.mrb[0].mxu0
        %v374 = vadd.f32 0.0, %v373
        %v375 = vpop.f32.mrb[0].mxu0
        %376 = vmatprep.mubr.f32.mxu0 0.0
        %377 = vmatmul.mubr.f32.gmra.mrb[0].mxu0 %v220
        %v378 = vpop.f32.mrb[0].mxu0
        %v379 = vadd.f32 0.0, %v378
        %v380 = vpop.f32.mrb[0].mxu0
        %381 = vdwg.mxu0
        %382 = vst [vmem:[%s200] sm:$0xff] %v304
        %383 = vst [vmem:[%s200 + $0x8] sm:$0xff] %v309
        %384 = vst [vmem:[%s200 + $0x10] sm:$0xff] %v314
        %385 = vst [vmem:[%s200 + $0x18] sm:$0xff] %v319
        %386 = vst [vmem:[%s200 + $0x20] sm:$0xff] %v324
        %387 = vst [vmem:[%s200 + $0x28] sm:$0xff] %v329
        %388 = vst [vmem:[%s200 + $0x30] sm:$0xff] %v334
        %389 = vst [vmem:[%s200 + $0x38] sm:$0xff] %v339
        %390 = vst [vmem:[%s200 + $0x40] sm:$0xff] %v344
        %391 = vst [vmem:[%s200 + $0x48] sm:$0xff] %v349
        %392 = vst [vmem:[%s200 + $0x50] sm:$0xff] %v354
        %393 = vst [vmem:[%s200 + $0x58] sm:$0xff] %v359
        %394 = vst [vmem:[%s200 + $0x60] sm:$0xff] %v364
        %395 = vst [vmem:[%s200 + $0x68] sm:$0xff] %v369
        %396 = vst [vmem:[%s200 + $0x70] sm:$0xff] %v374
        %397 = vst [vmem:[%s200 + $0x78] sm:$0xff] %v379
        %p398 = scmp.eq.s32.totalorder %s23, 0
        // Predicated region
        $region37: #{tpu_custom_call.1} parent=27 // pred_check
          %p399 = pneg %p398
        $region38: #{tpu_custom_call.1} parent=27 // pred_check_branch
          %401 = sbr.rel (%p399) target = $region40
        $region39: #{tpu_custom_call.1} parent=27 // pred_region
          %402 = vst [vmem:[#allocation8] sm:$0xff] 0.0
        $region40: #{tpu_custom_call.1} parent=27 // pred_fallthru
          _
        %v403 = vld [vmem:[#allocation8] sm:$0x1]
        %v404 = vadd.f32 %v304, %v309
        %v405 = vadd.f32 %v404, %v314
        %v406 = vadd.f32 %v405, %v319
        %v407 = vadd.f32 %v406, %v324
        %v408 = vadd.f32 %v407, %v329
        %v409 = vadd.f32 %v408, %v334
        %v410 = vadd.f32 %v409, %v339
        %v411 = vadd.f32 %v410, %v344
        %v412 = vadd.f32 %v411, %v349
        %v413 = vadd.f32 %v412, %v354
        %v414 = vadd.f32 %v413, %v359
        %v415 = vadd.f32 %v414, %v364
        %v416 = vadd.f32 %v415, %v369
        %v417 = vadd.f32 %v416, %v374
        %v418 = vadd.f32 %v417, %v379
        %v419 = vrot.slane %v418, 4
        %v420 = vadd.f32 %v418, %v419
        %v421 = vrot.slane %v420, 2
        %v422 = vadd.f32 %v420, %v421
        %v423 = vrot.slane %v422, 1
        %v424 = vadd.f32 %v422, %v423
        %v425 = vadd.f32 %v403, %v424
        %426 = vst [vmem:[#allocation8] sm:$0x1] %v425
        %v427 = vld [vmem:[#allocation8 + $0x1] sm:$0x1]
        %v428 = vmul.f32 %v304, %v304
        %v429 = vmul.f32 %v309, %v309
        %v430 = vmul.f32 %v314, %v314
        %v431 = vmul.f32 %v319, %v319
        %v432 = vmul.f32 %v324, %v324
        %v433 = vmul.f32 %v329, %v329
        %v434 = vmul.f32 %v334, %v334
        %v435 = vmul.f32 %v339, %v339
        %v436 = vmul.f32 %v344, %v344
        %v437 = vmul.f32 %v349, %v349
        %v438 = vmul.f32 %v354, %v354
        %v439 = vmul.f32 %v359, %v359
        %v440 = vmul.f32 %v364, %v364
        %v441 = vmul.f32 %v369, %v369
        %v442 = vmul.f32 %v374, %v374
        %v443 = vmul.f32 %v379, %v379
        %v444 = vadd.f32 %v428, %v429
        %v445 = vadd.f32 %v444, %v430
        %v446 = vadd.f32 %v445, %v431
        %v447 = vadd.f32 %v446, %v432
        %v448 = vadd.f32 %v447, %v433
        %v449 = vadd.f32 %v448, %v434
        %v450 = vadd.f32 %v449, %v435
        %v451 = vadd.f32 %v450, %v436
        %v452 = vadd.f32 %v451, %v437
        %v453 = vadd.f32 %v452, %v438
        %v454 = vadd.f32 %v453, %v439
        %v455 = vadd.f32 %v454, %v440
        %v456 = vadd.f32 %v455, %v441
        %v457 = vadd.f32 %v456, %v442
        %v458 = vadd.f32 %v457, %v443
        %v459 = vrot.slane %v458, 4
        %v460 = vadd.f32 %v458, %v459
        %v461 = vrot.slane %v460, 2
        %v462 = vadd.f32 %v460, %v461
        %v463 = vrot.slane %v462, 1
        %v464 = vadd.f32 %v462, %v463
        %v465 = vadd.f32 %v427, %v464
        %466 = vst [vmem:[#allocation8 + $0x1] sm:$0x1] %v465
        %s467 = sand.u32 %s78, 1
        %s468 = scalar_lea.sflag [#allocation4], %s467
        %s469 = sand.u32 %s78, 1
        %s470 = smul.addr %s469, 128
        %s471 = scalar_lea.vmem [#allocation7], %s470
        // Predicated region
        $region41: #{tpu_custom_call.1} parent=27 // pred_check
          %p472 = pneg %p88
        $region42: #{tpu_custom_call.1} parent=27 // pred_check_branch
          %474 = sbr.rel (%p472) target = $region44
        $region43: #{tpu_custom_call.1} parent=27 // pred_region
          %s475 = smul.u32 16, %s23
          %s477 = ssub.s32 2048, 2048
          %478 = vsyncadd %s468, %s477
          %s479 = smul.addr %s475, 128
          %s480 = scalar_lea.hbm %s2, %s479
          %s481 = sshll.u32 %s471, 4
          %s482 = int_to_ptr.vmem [resolvable:$true] %s481
          %487 = dma.vmem_to_hbm [thread:$0]  %s482, 2048, %s480, %s468, 128, 128, 8
        $region44: #{tpu_custom_call.1} parent=27 // pred_fallthru
          _
        // Predicated region
        $region45: #{tpu_custom_call.1} parent=27 // pred_check
          %p488 = pneg %p109
        $region46: #{tpu_custom_call.1} parent=27 // pred_check_branch
          %490 = sbr.rel (%p488) target = $region48
        $region47: #{tpu_custom_call.1} parent=27 // pred_region
          %s492 = ssub.s32 128, 128
          %493 = vsyncadd [#allocation9], %s492
          %s495 = sshll.u32 [#allocation8], 4
          %s496 = int_to_ptr.vmem [resolvable:$true] %s495
          %498 = dma.vmem_to_hbm [thread:$0]  %s496, 128, %s3, [#allocation9]
        $region48: #{tpu_custom_call.1} parent=27 // pred_fallthru
          _
        // Predicated region
        $region49: #{tpu_custom_call.1} parent=27 // pred_check
          %p499 = pneg %p109
        $region50: #{tpu_custom_call.1} parent=27 // pred_check_branch
          %501 = sbr.rel (%p499) target = $region52
        $region51: #{tpu_custom_call.1} parent=27 // pred_region
          %502 = dma.done [#allocation9], 128
        $region52: #{tpu_custom_call.1} parent=27 // pred_fallthru
          _
      $region28: #{tpu_custom_call.1} parent=5 // pred_fallthru
        _
      %p503 = scmp.le.s32.totalorder 2, %s18
      // Predicated region
      $region53: #{tpu_custom_call.1} parent=5 // pred_check
        %p504 = pneg %p503
      $region54: #{tpu_custom_call.1} parent=5 // pred_check_branch
        %506 = sbr.rel (%p504) target = $region56
      $region55: #{tpu_custom_call.1} parent=5 // pred_region
        %s507 = ssub.s32 %s18, 2
        // Predicated region
        $region57: #{tpu_custom_call.1} parent=55 // pred_check
          %p508 = pneg %p94
        $region58: #{tpu_custom_call.1} parent=55 // pred_check_branch
          %510 = sbr.rel (%p508) target = $region60
        $region59: #{tpu_custom_call.1} parent=55 // pred_region
          %s511 = sand.u32 %s79, 1
          %s512 = scalar_lea.sflag [#allocation4], %s511
          %s513 = sand.u32 %s79, 1
          %s514 = smul.addr %s513, 128
          %s515 = scalar_lea.vmem [#allocation7], %s514
          %516 = dma.done %s512, 2048
        $region60: #{tpu_custom_call.1} parent=55 // pred_fallthru
          _
      $region56: #{tpu_custom_call.1} parent=5 // pred_fallthru
        _
    $region6: #{tpu_custom_call.1} parent=1 // loop_footer
      %s22 = sadd.s32 1, %s18
    $region7: #{tpu_custom_call.1} parent=1 // loop_footer_branch
      %17 = sbr.rel target = $region3
    $region8: #{tpu_custom_call.1} parent=1 // loop_exit
      _
    %517 = vsyncpa [#allocation3], 1
    %s518 = scalar_lea.sflag [#allocation3], 1
    %519 = vsyncpa %s518, 1
    %520 = vsyncpa [#allocation6], 1
    %521 = vsyncpa [#allocation4], 1
    %s522 = scalar_lea.sflag [#allocation4], 1
    %523 = vsyncpa %s522, 1
    %524 = vsyncpa [#allocation9], 1

</llo_original>
